<compile_context>
chip_gen: v7x
topology: tpu7x:2x2x1
jax: 0.10.0
libtpu: 0.0.40
codegen_flags: <defaults>
</compile_context>

<pallas_src>
import functools

import jax
import jax.numpy as jnp
from jax.experimental import pallas as pl
from jax.experimental.pallas import tpu as pltpu


def _mlp_kernel(xt_ref, whT_ref, bh_ref, woT_ref, bo_ref, ot_ref):
    # xt_ref:  (n_in, tb)  x^T tile, batch on lanes (lane-dense)
    # whT_ref: (H, n_in)   wh^T, replicated across grid steps
    # bh_ref:  (H, 1)      hidden bias column, broadcasts over lanes
    # woT_ref: (1, H)      wo^T row, replicated
    # bo_ref:  (1, 1)      output bias scalar in SMEM
    # ot_ref:  (1, tb)     lane-dense output row
    zh = jnp.dot(whT_ref[...], xt_ref[...],
                 preferred_element_type=jnp.float32) + bh_ref[...]
    h = jnp.maximum(zh, 0.0)                                   # ReLU in f32
    zo = jnp.dot(woT_ref[...], h,
                 preferred_element_type=jnp.float32) + bo_ref[0, 0]
    ot_ref[...] = zo.astype(ot_ref.dtype)                      # single cast at store


def _pick_block_b(batch_padded, n_in, itemsize):
    """Lane-dense batch tile: multiple of 128, VMEM-safe, >=2 grid steps when possible."""
    # Keep the double-buffered x tile comfortably inside v7x's 64 MiB VMEM
    # (~8 MiB budget for 2 x-buffers), even for large n_in.
    vmem_budget = 8 * 1024 * 1024
    max_bb = max(128, (vmem_budget // max(1, 2 * n_in * itemsize)) // 128 * 128)
    bb = min(2048, max_bb, batch_padded)
    bb = max(128, (bb // 128) * 128)
    # Prefer >=2 grid steps so the "parallel" axis can shard across 2 TCs (v7x).
    if batch_padded >= 256 and batch_padded // bb < 2:
        bb = max(128, (batch_padded // 2) // 128 * 128)
    return bb


@functools.partial(jax.jit, static_argnames=("block_b", "use_bf16"))
def mlp_forward(x, wh, bh, wo, bo, *, block_b=None, use_bf16=False):
    """Fused MLP forward: relu(x @ wh + bh) @ wo + bo, computed in transposed layout."""
    B, n_in = x.shape
    H = wh.shape[1]

    in_dtype = jnp.bfloat16 if use_bf16 else x.dtype
    # Layout plumbing on the host side: present lane-dense operands to the kernel.
    xt = x.T.astype(in_dtype)                              # (n_in, B)  batch -> lanes
    whT = wh.T.astype(in_dtype)                            # (H, n_in)
    bhT = bh.reshape(1, H).T.astype(jnp.float32)           # (H, 1)
    woT = wo.reshape(H, 1).T.astype(jnp.float32)           # (1, H)
    bo2 = bo.reshape(1, 1).astype(jnp.float32)             # (1, 1) -> SMEM scalar

    # Pad the batch (lane) axis to a multiple of 128; padded lanes are sliced off.
    Bp = ((B + 127) // 128) * 128
    if Bp != B:
        xt = jnp.pad(xt, ((0, 0), (0, Bp - B)))

    if block_b is None:
        block_b = _pick_block_b(Bp, n_in, jnp.dtype(in_dtype).itemsize)
    grid = (pl.cdiv(Bp, block_b),)

    itemsize = jnp.dtype(in_dtype).itemsize
    flops = 2 * B * n_in * H + 2 * B * H
    bytes_accessed = (B * n_in * itemsize + n_in * H * itemsize
                      + 2 * H * 4 + 4 + B * 4)

    outT = pl.pallas_call(
        _mlp_kernel,
        out_shape=jax.ShapeDtypeStruct((1, Bp), jnp.float32),
        grid_spec=pltpu.PrefetchScalarGridSpec(
            num_scalar_prefetch=0,
            grid=grid,
            in_specs=[
                pl.BlockSpec((n_in, block_b), lambda i: (0, i)),   # x^T: tiled over batch lanes
                pl.BlockSpec((H, n_in), lambda i: (0, 0)),         # wh^T: replicated
                pl.BlockSpec((H, 1), lambda i: (0, 0)),            # bh^T: replicated
                pl.BlockSpec((1, H), lambda i: (0, 0)),            # wo^T: replicated
                pl.BlockSpec(memory_space=pltpu.MemorySpace.SMEM), # bo: scalar in SMEM
            ],
            out_specs=pl.BlockSpec((1, block_b), lambda i: (0, i)),
        ),
        compiler_params=pltpu.CompilerParams(
            dimension_semantics=("parallel",),
        ),
        cost_estimate=pl.CostEstimate(
            flops=flops, transcendentals=0, bytes_accessed=bytes_accessed),
    )(xt, whT, bhT, woT, bo2)

    return outT[:, :B].T                                    # (B, 1)


def reference_forward(x, wh, bh, wo, bo):
    zh = x @ wh + bh
    h = jnp.maximum(zh, 0.0)
    return h @ wo + bo


if __name__ == "__main__":
    # Shapes consistent with the module: n_inputs features,
    # hidden = round(2/3 * n_inputs), output = 1.
    BATCH = 256                              # 2 lane-dense tiles of 128 -> 2 parallel grid steps
    N_INPUTS = 24
    HIDDEN = round(2.0 / 3.0 * N_INPUTS)     # 16
    OUT = 1

    key = jax.random.PRNGKey(0)
    kx, kwh, kbh, kwo, kbo = jax.random.split(key, 5)

    # Deterministic, torch.randn-like (standard normal) parameter init.
    x = jax.random.normal(kx, (BATCH, N_INPUTS), dtype=jnp.float32)
    wh = jax.random.normal(kwh, (N_INPUTS, HIDDEN), dtype=jnp.float32)
    bh = jax.random.normal(kbh, (1, HIDDEN), dtype=jnp.float32)
    wo = jax.random.normal(kwo, (HIDDEN, OUT), dtype=jnp.float32)
    bo = jax.random.normal(kbo, (1, OUT), dtype=jnp.float32)

    out = mlp_forward(x, wh, bh, wo, bo)
    jax.block_until_ready(out)

    ref = reference_forward(x, wh, bh, wo, bo)
    assert out.shape == (BATCH, OUT), out.shape
    assert jnp.allclose(out, ref, atol=1e-3, rtol=1e-4), "mismatch vs reference"

    print("KERNEL_OK")
</pallas_src>

<mosaic_0001>
module attributes {stable_mosaic.version = 11 : i64} {
  func.func @_mlp_kernel(%arg0: i32, %arg1: memref<24x128xf32, #tpu.memory_space<vmem>>, %arg2: memref<16x24xf32, #tpu.memory_space<vmem>>, %arg3: memref<16x1xf32, #tpu.memory_space<vmem>>, %arg4: memref<1x16xf32, #tpu.memory_space<vmem>>, %arg5: memref<1x1xf32, #tpu.memory_space<smem>>, %arg6: memref<1x128xf32, #tpu.memory_space<vmem>>) attributes {dimension_semantics = [#tpu.dimension_semantics<parallel>], iteration_bounds = array<i64: 2>, scalar_prefetch = 0 : i64, scratch_operands = 0 : i64, tpu.core_type = #tpu.core_type<tc>, window_params = [{transform_indices = @transform_0, window_bounds = array<i64: 24, 128>}, {pipeline_mode = #tpu.pipeline_mode<synchronous>, transform_indices = @transform_1, window_bounds = array<i64: 16, 24>}, {pipeline_mode = #tpu.pipeline_mode<synchronous>, transform_indices = @transform_2, window_bounds = array<i64: 16, 1>}, {pipeline_mode = #tpu.pipeline_mode<synchronous>, transform_indices = @transform_3, window_bounds = array<i64: 1, 16>}, {transform_indices = @transform_4, window_bounds = array<i64: 1, 1>}, {transform_indices = @transform_5, window_bounds = array<i64: 1, 128>}]} {
    %c0 = arith.constant 0 : index
    %c0_0 = arith.constant 0 : index
    %0 = vector.load %arg2[%c0, %c0_0] : memref<16x24xf32, #tpu.memory_space<vmem>>, vector<16x24xf32>
    %c0_1 = arith.constant 0 : index
    %c0_2 = arith.constant 0 : index
    %1 = vector.load %arg1[%c0_1, %c0_2] : memref<24x128xf32, #tpu.memory_space<vmem>>, vector<24x128xf32>
    %cst = arith.constant dense<0.000000e+00> : vector<16x128xf32>
    %2 = tpu.matmul %0, %1, %cst {dimension_numbers = #tpu.dot_dimension_numbers<[1], [0], [0], [1], [0, 0, 1, 1], [], []>} : vector<16x24xf32>, vector<24x128xf32>, vector<16x128xf32> -> vector<16x128xf32>
    %c0_3 = arith.constant 0 : index
    %c0_4 = arith.constant 0 : index
    %3 = vector.load %arg3[%c0_3, %c0_4] : memref<16x1xf32, #tpu.memory_space<vmem>>, vector<16x1xf32>
    %4 = vector.broadcast %3 : vector<16x1xf32> to vector<16x128xf32>
    %5 = arith.addf %2, %4 : vector<16x128xf32>
    %cst_5 = arith.constant 0.000000e+00 : f32
    %6 = vector.broadcast %cst_5 : f32 to vector<16x128xf32>
    %7 = arith.maximumf %5, %6 : vector<16x128xf32>
    %c0_6 = arith.constant 0 : index
    %c0_7 = arith.constant 0 : index
    %8 = vector.load %arg4[%c0_6, %c0_7] : memref<1x16xf32, #tpu.memory_space<vmem>>, vector<1x16xf32>
    %cst_8 = arith.constant dense<0.000000e+00> : vector<1x128xf32>
    %9 = tpu.matmul %8, %7, %cst_8 {dimension_numbers = #tpu.dot_dimension_numbers<[1], [0], [0], [1], [0, 0, 1, 1], [], []>} : vector<1x16xf32>, vector<16x128xf32>, vector<1x128xf32> -> vector<1x128xf32>
    %c0_9 = arith.constant 0 : index
    %c0_10 = arith.constant 0 : index
    %10 = memref.load %arg5[%c0_9, %c0_10] : memref<1x1xf32, #tpu.memory_space<smem>>
    %11 = vector.broadcast %10 : f32 to vector<1x128xf32>
    %12 = arith.addf %9, %11 : vector<1x128xf32>
    %c0_11 = arith.constant 0 : index
    %c0_12 = arith.constant 0 : index
    %13 = vector.load %arg6[%c0_11, %c0_12] : memref<1x128xf32, #tpu.memory_space<vmem>>, vector<1x128xf32>
    tpu.vector_store %arg6[%c0_11, %c0_12], %12 {strides = array<i32>} : memref<1x128xf32, #tpu.memory_space<vmem>>, vector<1x128xf32>,
    return
  }
  func.func @transform_0(%arg0: i32) -> (i32, i32) {
    %c0_i32 = arith.constant 0 : i32
    %c0_i32_0 = arith.constant 0 : i32
    return %c0_i32, %arg0 : i32, i32
  }
  func.func @transform_1(%arg0: i32) -> (i32, i32) {
    %c0_i32 = arith.constant 0 : i32
    %c0_i32_0 = arith.constant 0 : i32
    %c0_i32_1 = arith.constant 0 : i32
    return %c0_i32, %c0_i32_0 : i32, i32
  }
  func.func @transform_2(%arg0: i32) -> (i32, i32) {
    %c0_i32 = arith.constant 0 : i32
    %c0_i32_0 = arith.constant 0 : i32
    %c0_i32_1 = arith.constant 0 : i32
    return %c0_i32, %c0_i32_0 : i32, i32
  }
  func.func @transform_3(%arg0: i32) -> (i32, i32) {
    %c0_i32 = arith.constant 0 : i32
    %c0_i32_0 = arith.constant 0 : i32
    %c0_i32_1 = arith.constant 0 : i32
    return %c0_i32, %c0_i32_0 : i32, i32
  }
  func.func @transform_4(%arg0: i32) -> (i32, i32) {
    %c0_i32 = arith.constant 0 : i32
    %c0_i32_0 = arith.constant 0 : i32
    %c0_i32_1 = arith.constant 0 : i32
    return %c0_i32, %c0_i32_0 : i32, i32
  }
  func.func @transform_5(%arg0: i32) -> (i32, i32) {
    %c0_i32 = arith.constant 0 : i32
    %c0_i32_0 = arith.constant 0 : i32
    return %c0_i32, %arg0 : i32, i32
  }
}

</mosaic_0001>

<llo_original>
// kernel: mlp_forward.1
$region0: #{mlp_forward.1}
  #allocation0 [shape = 'u32[]', space=smem, size = 0x4, offset = 0x4, fixed_abs, tag = 'smem constant byte address 0x4 - core index']
  #allocation1 [shape = 'u32[144,128]{1,0:T(1,128)}', space=vmem, size = 0x12000, scoped, tag = 'internal scratch']
  #allocation2 [shape = 'f32[1,1]{1,0:T(1,128)S(6)}', space=smem, size = 0x200, scoped, tag = 'scoped memory for mlp_forward.1']
  %s0 = inlined_call_operand.hbm [shape: f32[24,256], index: 0, kind: input, shape index: {}]
  %s1 = inlined_call_operand.vmem [shape: f32[16,24], index: 1, kind: input, shape index: {}]
  %s2 = inlined_call_operand.vmem [shape: f32[16,1], index: 2, kind: input, shape index: {}]
  %s3 = inlined_call_operand.vmem [shape: f32[1,16], index: 3, kind: input, shape index: {}]
  %s4 = inlined_call_operand.<no memory space> [shape: f32[1,1], index: 4, kind: input, shape index: {}]
  %s5 = inlined_call_operand.hbm [shape: f32[1,256], index: 5, kind: output, shape index: {}]
  %s6 = sld [smem:[#allocation0]]
  $region57: #{mlp_forward.1} parent=0
    _
  %s8 = ssub.s32 1, %s6
  %s9 = scalar_select 0, %s8, %s6
  %10 = sst [smem:[#allocation2]] %s4
  $region1: #{mlp_forward.1} parent=0
    #allocation3 [shape = 'u8[24576]{0}', space=vmem, size = 0x6000, scoped, tag = 'input window, operand 0']
    #allocation4 [shape = 's32[2]{0}', space=sflag, size = 0x8, scoped, tag = 'scoped memory for mlp_forward.1']
    #allocation5 [shape = 's32[2]{0}', space=sflag, size = 0x8, scoped, tag = 'scoped memory for mlp_forward.1']
    #allocation6 [shape = 'u8[1024]{0}', space=vmem, size = 0x400, scoped, tag = 'output window, operand 0']
    %11 = vsyncpa [#allocation4], 0
    %s12 = scalar_lea.sflag [#allocation4], 1
    %13 = vsyncpa %s12, 0
    %14 = vsyncpa [#allocation5], 0
    %s15 = scalar_lea.sflag [#allocation5], 1
    %16 = vsyncpa %s15, 0
    loop: start=0, step=1, limit=4
    $region2: #{mlp_forward.1} parent=1 // loop_pre_header
      _
    $region3: #{mlp_forward.1} parent=1 // loop_header
      %s18 = sphi 0, %s22
      %p19 = scmp.ge.s32.totalorder %s18, 4
      %s28 = sphi 0, %s30
      %s31 = sphi 0, %s28
      %s32 = sphi 0, %s31
      %s48 = sphi 0, %s32
      %s52 = sphi 0, %s52
      %s54 = sphi 0, %s52
      %s55 = sphi 0, %s54
      %s69 = sphi 0, %s55
      %s73 = sphi 0, %s73
      %s75 = sphi 0, %s73
      %s76 = sphi 0, %s75
      %s90 = sphi 0, %s76
      %s94 = sphi 0, %s94
      %s96 = sphi 0, %s94
      %s97 = sphi 0, %s96
      %s111 = sphi 0, %s97
      %s115 = sphi 0, %s115
      %s117 = sphi 0, %s115
      %s118 = sphi 0, %s117
      %s132 = sphi 0, %s118
      %s138 = sphi 0, %s140
      %s141 = sphi 0, %s138
      %s142 = sphi 0, %s141
      %s158 = sphi 0, %s142
    $region4: #{mlp_forward.1} parent=1 // loop_header_branch
      %21 = sbr.rel (%p19) target = $region8
    $region5: #{mlp_forward.1} parent=1 // loop_body
      %s23 = ssub.s32 %s18, 1
      %s24 = ssub.s32 %s18, 2
      %s25 = sadd.s32 %s18, 1
      %s26 = ssub.s32 %s18, %s25
      %p27 = scmp.eq.s32.totalorder %s26, 0
      %s29 = sadd.s32 %s28, 1
      %s30 = scalar_select %p27, %s28, %s29
      %p33 = pneg %p27
      %p34 = scmp.eq.s32.totalorder %s18, 1
      %p35 = por %p33, %p34
      %p36 = scmp.ne.s32.totalorder %s28, %s31
      %p37 = scmp.eq.s32.totalorder %s18, 0
      %p38 = por %p36, %p37
      %p39 = scmp.ne.s32.totalorder %s28, %s31
      %p40 = scmp.eq.s32.totalorder %s23, 1
      %p41 = por %p39, %p40
      %p42 = scmp.ne.s32.totalorder %s31, %s32
      %p43 = scmp.eq.s32.totalorder %s23, 0
      %p44 = por %p42, %p43
      %p45 = scmp.ne.s32.totalorder %s31, %s32
      %p46 = scmp.eq.s32.totalorder %s24, 1
      %p47 = por %p45, %p46
      %p49 = scmp.ne.s32.totalorder %s32, %s48
      %p50 = scmp.eq.s32.totalorder %s24, 0
      %p51 = por %p49, %p50
      %s53 = sadd.s32 %s52, 1
      %p56 = scmp.eq.s32.totalorder %s18, 1
      %p57 = scmp.ne.s32.totalorder %s52, %s54
      %p58 = scmp.eq.s32.totalorder %s18, 0
      %p59 = por %p57, %p58
      %p60 = scmp.ne.s32.totalorder %s52, %s54
      %p61 = scmp.eq.s32.totalorder %s23, 1
      %p62 = por %p60, %p61
      %p63 = scmp.ne.s32.totalorder %s54, %s55
      %p64 = scmp.eq.s32.totalorder %s23, 0
      %p65 = por %p63, %p64
      %p66 = scmp.ne.s32.totalorder %s54, %s55
      %p67 = scmp.eq.s32.totalorder %s24, 1
      %p68 = por %p66, %p67
      %p70 = scmp.ne.s32.totalorder %s55, %s69
      %p71 = scmp.eq.s32.totalorder %s24, 0
      %p72 = por %p70, %p71
      %s74 = sadd.s32 %s73, 1
      %p77 = scmp.eq.s32.totalorder %s18, 1
      %p78 = scmp.ne.s32.totalorder %s73, %s75
      %p79 = scmp.eq.s32.totalorder %s18, 0
      %p80 = por %p78, %p79
      %p81 = scmp.ne.s32.totalorder %s73, %s75
      %p82 = scmp.eq.s32.totalorder %s23, 1
      %p83 = por %p81, %p82
      %p84 = scmp.ne.s32.totalorder %s75, %s76
      %p85 = scmp.eq.s32.totalorder %s23, 0
      %p86 = por %p84, %p85
      %p87 = scmp.ne.s32.totalorder %s75, %s76
      %p88 = scmp.eq.s32.totalorder %s24, 1
      %p89 = por %p87, %p88
      %p91 = scmp.ne.s32.totalorder %s76, %s90
      %p92 = scmp.eq.s32.totalorder %s24, 0
      %p93 = por %p91, %p92
      %s95 = sadd.s32 %s94, 1
      %p98 = scmp.eq.s32.totalorder %s18, 1
      %p99 = scmp.ne.s32.totalorder %s94, %s96
      %p100 = scmp.eq.s32.totalorder %s18, 0
      %p101 = por %p99, %p100
      %p102 = scmp.ne.s32.totalorder %s94, %s96
      %p103 = scmp.eq.s32.totalorder %s23, 1
      %p104 = por %p102, %p103
      %p105 = scmp.ne.s32.totalorder %s96, %s97
      %p106 = scmp.eq.s32.totalorder %s23, 0
      %p107 = por %p105, %p106
      %p108 = scmp.ne.s32.totalorder %s96, %s97
      %p109 = scmp.eq.s32.totalorder %s24, 1
      %p110 = por %p108, %p109
      %p112 = scmp.ne.s32.totalorder %s97, %s111
      %p113 = scmp.eq.s32.totalorder %s24, 0
      %p114 = por %p112, %p113
      %s116 = sadd.s32 %s115, 1
      %p119 = scmp.eq.s32.totalorder %s18, 1
      %p120 = scmp.ne.s32.totalorder %s115, %s117
      %p121 = scmp.eq.s32.totalorder %s18, 0
      %p122 = por %p120, %p121
      %p123 = scmp.ne.s32.totalorder %s115, %s117
      %p124 = scmp.eq.s32.totalorder %s23, 1
      %p125 = por %p123, %p124
      %p126 = scmp.ne.s32.totalorder %s117, %s118
      %p127 = scmp.eq.s32.totalorder %s23, 0
      %p128 = por %p126, %p127
      %p129 = scmp.ne.s32.totalorder %s117, %s118
      %p130 = scmp.eq.s32.totalorder %s24, 1
      %p131 = por %p129, %p130
      %p133 = scmp.ne.s32.totalorder %s118, %s132
      %p134 = scmp.eq.s32.totalorder %s24, 0
      %p135 = por %p133, %p134
      %s136 = ssub.s32 %s18, %s25
      %p137 = scmp.eq.s32.totalorder %s136, 0
      %s139 = sadd.s32 %s138, 1
      %s140 = scalar_select %p137, %s138, %s139
      %p143 = pneg %p137
      %p144 = scmp.eq.s32.totalorder %s18, 1
      %p145 = por %p143, %p144
      %p146 = scmp.ne.s32.totalorder %s138, %s141
      %p147 = scmp.eq.s32.totalorder %s18, 0
      %p148 = por %p146, %p147
      %p149 = scmp.ne.s32.totalorder %s138, %s141
      %p150 = scmp.eq.s32.totalorder %s23, 1
      %p151 = por %p149, %p150
      %p152 = scmp.ne.s32.totalorder %s141, %s142
      %p153 = scmp.eq.s32.totalorder %s23, 0
      %p154 = por %p152, %p153
      %p155 = scmp.ne.s32.totalorder %s141, %s142
      %p156 = scmp.eq.s32.totalorder %s24, 1
      %p157 = por %p155, %p156
      %p159 = scmp.ne.s32.totalorder %s142, %s158
      %p160 = scmp.eq.s32.totalorder %s24, 0
      %p161 = por %p159, %p160
      %p162 = scmp.le.s32.totalorder 1, %s18
      %p163 = scmp.lt.s32.totalorder %s18, 3
      %p164 = pnand %p162, %p163
      %p165 = pneg %p164
      // Predicated region
      $region9: #{mlp_forward.1} parent=5 // pred_check
        _
      $region10: #{mlp_forward.1} parent=5 // pred_check_branch
        %167 = sbr.rel (%p164) target = $region12
      $region11: #{mlp_forward.1} parent=5 // pred_region
        %s168 = ssub.s32 %s18, 1
        // Predicated region
        $region13: #{mlp_forward.1} parent=11 // pred_check
          %p169 = pneg %p65
        $region14: #{mlp_forward.1} parent=11 // pred_check_branch
          %171 = sbr.rel (%p169) target = $region16
        $region15: #{mlp_forward.1} parent=11 // pred_region
          _
        $region16: #{mlp_forward.1} parent=11 // pred_fallthru
          _
        // Predicated region
        $region17: #{mlp_forward.1} parent=11 // pred_check
          %p172 = pneg %p86
        $region18: #{mlp_forward.1} parent=11 // pred_check_branch
          %174 = sbr.rel (%p172) target = $region20
        $region19: #{mlp_forward.1} parent=11 // pred_region
          _
        $region20: #{mlp_forward.1} parent=11 // pred_fallthru
          _
        // Predicated region
        $region21: #{mlp_forward.1} parent=11 // pred_check
          %p175 = pneg %p107
        $region22: #{mlp_forward.1} parent=11 // pred_check_branch
          %177 = sbr.rel (%p175) target = $region24
        $region23: #{mlp_forward.1} parent=11 // pred_region
          _
        $region24: #{mlp_forward.1} parent=11 // pred_fallthru
          _
        // Predicated region
        $region25: #{mlp_forward.1} parent=11 // pred_check
          %p178 = pneg %p128
        $region26: #{mlp_forward.1} parent=11 // pred_check_branch
          %180 = sbr.rel (%p178) target = $region28
        $region27: #{mlp_forward.1} parent=11 // pred_region
          _
        $region28: #{mlp_forward.1} parent=11 // pred_fallthru
          _
      $region12: #{mlp_forward.1} parent=5 // pred_fallthru
        _
      %p181 = scmp.lt.s32.totalorder %s18, 2
      // Predicated region
      $region29: #{mlp_forward.1} parent=5 // pred_check
        %p182 = pneg %p181
      $region30: #{mlp_forward.1} parent=5 // pred_check_branch
        %184 = sbr.rel (%p182) target = $region32
      $region31: #{mlp_forward.1} parent=5 // pred_region
        // Predicated region
        $region33: #{mlp_forward.1} parent=31 // pred_check
          %p185 = pneg %p38
        $region34: #{mlp_forward.1} parent=31 // pred_check_branch
          %187 = sbr.rel (%p185) target = $region36
        $region35: #{mlp_forward.1} parent=31 // pred_region
          %s188 = sand.u32 %s28, 1
          %s189 = scalar_lea.sflag [#allocation4], %s188
          %s190 = sand.u32 %s28, 1
          %s191 = smul.addr %s190, 24
          %s192 = scalar_lea.vmem [#allocation3], %s191
          %s194 = ssub.s32 384, 384
          %195 = vsyncadd %s189, %s194
          %s196 = smul.addr %s18, 128
          %s197 = scalar_lea.hbm %s0, %s196
          %s198 = sshll.u32 %s192, 4
          %s199 = int_to_ptr.vmem [resolvable:$true] %s198
          %204 = dma.hbm_to_vmem [thread:$0]  %s197, 384, %s199, %s189, 256, 128, 8
        $region36: #{mlp_forward.1} parent=31 // pred_fallthru
          _
      $region32: #{mlp_forward.1} parent=5 // pred_fallthru
        _
      %p205 = scmp.le.s32.totalorder 1, %s18
      %p206 = scmp.lt.s32.totalorder %s18, 3
      %p207 = pnand %p205, %p206
      %p208 = pneg %p207
      // Predicated region
      $region37: #{mlp_forward.1} parent=5 // pred_check
        _
      $region38: #{mlp_forward.1} parent=5 // pred_check_branch
        %210 = sbr.rel (%p207) target = $region40
      $region39: #{mlp_forward.1} parent=5 // pred_region
        %s211 = ssub.s32 %s18, 1
        %s212 = sand.u32 %s31, 1
        %s213 = scalar_lea.sflag [#allocation4], %s212
        %s214 = sand.u32 %s31, 1
        %s215 = smul.addr %s214, 24
        %s216 = scalar_lea.vmem [#allocation3], %s215
        // Predicated region
        $region41: #{mlp_forward.1} parent=39 // pred_check
          %p217 = pneg %p44
        $region42: #{mlp_forward.1} parent=39 // pred_check_branch
          %219 = sbr.rel (%p217) target = $region44
        $region43: #{mlp_forward.1} parent=39 // pred_region
          %220 = dma.done %s213, 384
        $region44: #{mlp_forward.1} parent=39 // pred_fallthru
          _
        %s221 = sand.u32 %s31, 1
        %s222 = scalar_lea.sflag [#allocation4], %s221
        %s223 = sand.u32 %s31, 1
        %s224 = smul.addr %s223, 24
        %s225 = scalar_lea.vmem [#allocation3], %s224
        %p226 = pneg %p44
        %p227 = pneg %p41
        %p228 = pneg %p65
        %p229 = pneg %p62
        %p230 = pneg %p86
        %p231 = pneg %p83
        %p232 = pneg %p107
        %p233 = pneg %p104
        %p234 = pneg %p128
        %p235 = pneg %p125
        %p236 = pneg %p154
        %p237 = pneg %p151
        %s238 = sand.u32 %s141, 1
        %s239 = scalar_lea.sflag [#allocation5], %s238
        %s240 = sand.u32 %s141, 1
        %s241 = scalar_lea.vmem [#allocation6], %s240
        %v242 = vld [vmem:[%s1] sm:$0xff]
        %v243 = vld [vmem:[%s1 + $0x8] sm:$0xff]
        %v244 = vld [vmem:[%s216] sm:$0xff]
        %v245 = vld [vmem:[%s216 + $0x8] sm:$0xff]
        %v246 = vld [vmem:[%s216 + $0x10] sm:$0xff]
        %v247 = vld [vmem:[%s2] sm:$0xff]
        %v248 = vld [vmem:[%s2 + $0x8] sm:$0xff]
        %250 = vset.pattern.permute.xlu0 0
        %251 = vperm.xlu0 %250, %v247
        %v252 = vpop.permute.xlu0 %251
        %255 = vset.pattern.permute.xlu0 0
        %256 = vperm.xlu0 %255, %v248
        %v257 = vpop.permute.xlu0 %256
        %vm259 = vcmask 195584
        %v261 = vsel %vm259, %v242, 0
        %v264 = vsel %vm259, %v243, 0
        %266 = vmatprep.subr.mxu0 0.0
        %267 = vmatpush1.msra.mxu0 %v244
        %268 = vmatprep.subr.mxu0 0.0
        %269 = vmatpush1.msra.mxu0 %v245
        %270 = vmatprep.subr.mxu0 0.0
        %271 = vmatpush1.msra.mxu0 %v246
        %272 = vmatprep.subr.mxu0 0.0
        %273 = vmatpush1.msra.mxu0 0.0
        %274 = vmatprep.subr.mxu0 0.0
        %275 = vmatpush1.msra.mxu0 0.0
        %276 = vmatprep.subr.mxu0 0.0
        %277 = vmatpush1.msra.mxu0 0.0
        %278 = vmatprep.subr.mxu0 0.0
        %279 = vmatpush1.msra.mxu0 0.0
        %280 = vmatprep.subr.mxu0 0.0
        %281 = vmatpush1.msra.mxu0 0.0
        %282 = vmatprep.subr.mxu0 0.0
        %283 = vmatpush1.msra.mxu0 0.0
        %284 = vmatprep.subr.mxu0 0.0
        %285 = vmatpush1.msra.mxu0 0.0
        %286 = vmatprep.subr.mxu0 0.0
        %287 = vmatpush1.msra.mxu0 0.0
        %288 = vmatprep.subr.mxu0 0.0
        %289 = vmatpush1.msra.mxu0 0.0
        %290 = vmatprep.subr.mxu0 0.0
        %291 = vmatpush1.msra.mxu0 0.0
        %292 = vmatprep.subr.mxu0 0.0
        %293 = vmatpush1.msra.mxu0 0.0
        %294 = vmatprep.subr.mxu0 0.0
        %295 = vmatpush1.msra.mxu0 0.0
        %296 = vmatprep.subr.mxu0 0.0
        %297 = vmatpush1.msra.mxu0 0.0
        %298 = vmatprep.subr.mxu0 0.0
        %299 = vmatpush1.msra.mxu0 0.0
        %300 = vmatprep.subr.mxu0 0.0
        %301 = vmatpush1.msra.mxu0 0.0
        %302 = vmatprep.subr.mxu0 0.0
        %303 = vmatpush1.msra.mxu0 0.0
        %304 = vmatprep.subr.mxu0 0.0
        %305 = vmatpush1.msra.mxu0 0.0
        %306 = vmatprep.subr.mxu0 0.0
        %307 = vmatpush1.msra.mxu0 0.0
        %308 = vmatprep.subr.mxu0 0.0
        %309 = vmatpush1.msra.mxu0 0.0
        %310 = vmatprep.subr.mxu0 0.0
        %311 = vmatpush1.msra.mxu0 0.0
        %312 = vmatprep.subr.mxu0 0.0
        %313 = vmatpush1.msra.mxu0 0.0
        %314 = vmatprep.subr.mxu0 0.0
        %315 = vmatpush1.msra.mxu0 0.0
        %316 = vmatprep.subr.mxu0 0.0
        %317 = vmatpush1.msra.mxu0 0.0
        %318 = vmatprep.subr.mxu0 0.0
        %319 = vmatpush1.msra.mxu0 0.0
        %320 = vmatprep.subr.mxu0 0.0
        %321 = vmatpush1.msra.mxu0 0.0
        %322 = vmatprep.subr.mxu0 0.0
        %323 = vmatpush1.msra.mxu0 0.0
        %324 = vmatprep.subr.mxu0 0.0
        %325 = vmatpush1.msra.mxu0 0.0
        %326 = vmatprep.subr.mxu0 0.0
        %327 = vmatpush1.msra.mxu0 0.0
        %328 = vmatprep.subr.mxu0 0.0
        %329 = vmatpush1.msra.mxu0 0.0
        %330 = vmatprep.mubr.f32.mxu0 0.0
        %331 = vmatmul.mubr.f32.gmra.mrb[0].mxu0 %v261
        %v332 = vpop.f32.mrb[0].mxu0
        %v333 = vadd.f32 %v252, %v332
        %v334 = vpop.f32.mrb[0].mxu0
        %335 = vmatprep.mubr.f32.mxu0 0.0
        %336 = vmatmul.mubr.f32.gmra.mrb[0].mxu0 %v264
        %v337 = vpop.f32.mrb[0].mxu0
        %v338 = vadd.f32 %v257, %v337
        %v339 = vpop.f32.mrb[0].mxu0
        %340 = vdwg.mxu0
        %v341 = vmax.f32 %v333, 0.0
        %v342 = vmax.f32 %v338, 0.0
        %v343 = vld [vmem:[%s3] sm:$0x1]
        %s344 = sld [smem:[#allocation2]]
        %v345 = vstv %s344
        %vm346 = vcmask 130048
        %v348 = vsel %vm346, %v343, 0
        %350 = vmatprep.subr.mxu0 0.0
        %351 = vmatpush1.msra.mxu0 %v341
        %352 = vmatprep.subr.mxu0 0.0
        %353 = vmatpush1.msra.mxu0 %v342
        %354 = vmatprep.subr.mxu0 0.0
        %355 = vmatpush1.msra.mxu0 0.0
        %356 = vmatprep.subr.mxu0 0.0
        %357 = vmatpush1.msra.mxu0 0.0
        %358 = vmatprep.subr.mxu0 0.0
        %359 = vmatpush1.msra.mxu0 0.0
        %360 = vmatprep.subr.mxu0 0.0
        %361 = vmatpush1.msra.mxu0 0.0
        %362 = vmatprep.subr.mxu0 0.0
        %363 = vmatpush1.msra.mxu0 0.0
        %364 = vmatprep.subr.mxu0 0.0
        %365 = vmatpush1.msra.mxu0 0.0
        %366 = vmatprep.subr.mxu0 0.0
        %367 = vmatpush1.msra.mxu0 0.0
        %368 = vmatprep.subr.mxu0 0.0
        %369 = vmatpush1.msra.mxu0 0.0
        %370 = vmatprep.subr.mxu0 0.0
        %371 = vmatpush1.msra.mxu0 0.0
        %372 = vmatprep.subr.mxu0 0.0
        %373 = vmatpush1.msra.mxu0 0.0
        %374 = vmatprep.subr.mxu0 0.0
        %375 = vmatpush1.msra.mxu0 0.0
        %376 = vmatprep.subr.mxu0 0.0
        %377 = vmatpush1.msra.mxu0 0.0
        %378 = vmatprep.subr.mxu0 0.0
        %379 = vmatpush1.msra.mxu0 0.0
        %380 = vmatprep.subr.mxu0 0.0
        %381 = vmatpush1.msra.mxu0 0.0
        %382 = vmatprep.subr.mxu0 0.0
        %383 = vmatpush1.msra.mxu0 0.0
        %384 = vmatprep.subr.mxu0 0.0
        %385 = vmatpush1.msra.mxu0 0.0
        %386 = vmatprep.subr.mxu0 0.0
        %387 = vmatpush1.msra.mxu0 0.0
        %388 = vmatprep.subr.mxu0 0.0
        %389 = vmatpush1.msra.mxu0 0.0
        %390 = vmatprep.subr.mxu0 0.0
        %391 = vmatpush1.msra.mxu0 0.0
        %392 = vmatprep.subr.mxu0 0.0
        %393 = vmatpush1.msra.mxu0 0.0
        %394 = vmatprep.subr.mxu0 0.0
        %395 = vmatpush1.msra.mxu0 0.0
        %396 = vmatprep.subr.mxu0 0.0
        %397 = vmatpush1.msra.mxu0 0.0
        %398 = vmatprep.subr.mxu0 0.0
        %399 = vmatpush1.msra.mxu0 0.0
        %400 = vmatprep.subr.mxu0 0.0
        %401 = vmatpush1.msra.mxu0 0.0
        %402 = vmatprep.subr.mxu0 0.0
        %403 = vmatpush1.msra.mxu0 0.0
        %404 = vmatprep.subr.mxu0 0.0
        %405 = vmatpush1.msra.mxu0 0.0
        %406 = vmatprep.subr.mxu0 0.0
        %407 = vmatpush1.msra.mxu0 0.0
        %408 = vmatprep.subr.mxu0 0.0
        %409 = vmatpush1.msra.mxu0 0.0
        %410 = vmatprep.subr.mxu0 0.0
        %411 = vmatpush1.msra.mxu0 0.0
        %412 = vmatprep.subr.mxu0 0.0
        %413 = vmatpush1.msra.mxu0 0.0
        %414 = vmatprep.mubr.f32.mxu0 0.0
        %415 = vmatmul.mubr.f32.gmra.mrb[0].mxu0 %v348
        %v416 = vpop.f32.mrb[0].mxu0
        %v417 = vadd.f32 %v345, %v416
        %v418 = vpop.f32.mrb[0].mxu0
        %419 = vdwg.mxu0
        %420 = vst [vmem:[%s241] sm:$0x1] %v417
        %s421 = sand.u32 %s141, 1
        %s422 = scalar_lea.sflag [#allocation5], %s421
        %s423 = sand.u32 %s141, 1
        %s424 = scalar_lea.vmem [#allocation6], %s423
        // Predicated region
        $region45: #{mlp_forward.1} parent=39 // pred_check
          %p425 = pneg %p151
        $region46: #{mlp_forward.1} parent=39 // pred_check_branch
          %427 = sbr.rel (%p425) target = $region48
        $region47: #{mlp_forward.1} parent=39 // pred_region
          %s429 = ssub.s32 16, 16
          %430 = vsyncadd %s422, %s429
          %s431 = smul.addr %s23, 16
          %s432 = scalar_lea.hbm %s5, %s431
          %s434 = sshll.u32 %s424, 4
          %s435 = int_to_ptr.vmem [resolvable:$true] %s434
          %437 = dma.vmem_to_hbm [thread:$0]  %s435, 16, %s432, %s422
        $region48: #{mlp_forward.1} parent=39 // pred_fallthru
          _
      $region40: #{mlp_forward.1} parent=5 // pred_fallthru
        _
      %p438 = scmp.le.s32.totalorder 2, %s18
      // Predicated region
      $region49: #{mlp_forward.1} parent=5 // pred_check
        %p439 = pneg %p438
      $region50: #{mlp_forward.1} parent=5 // pred_check_branch
        %441 = sbr.rel (%p439) target = $region52
      $region51: #{mlp_forward.1} parent=5 // pred_region
        %s442 = ssub.s32 %s18, 2
        // Predicated region
        $region53: #{mlp_forward.1} parent=51 // pred_check
          %p443 = pneg %p157
        $region54: #{mlp_forward.1} parent=51 // pred_check_branch
          %445 = sbr.rel (%p443) target = $region56
        $region55: #{mlp_forward.1} parent=51 // pred_region
          %s446 = sand.u32 %s142, 1
          %s447 = scalar_lea.sflag [#allocation5], %s446
          %s448 = sand.u32 %s142, 1
          %s449 = scalar_lea.vmem [#allocation6], %s448
          %450 = dma.done %s447, 16
        $region56: #{mlp_forward.1} parent=51 // pred_fallthru
          _
      $region52: #{mlp_forward.1} parent=5 // pred_fallthru
        _
    $region6: #{mlp_forward.1} parent=1 // loop_footer
      %s22 = sadd.s32 1, %s18
    $region7: #{mlp_forward.1} parent=1 // loop_footer_branch
      %17 = sbr.rel target = $region3
    $region8: #{mlp_forward.1} parent=1 // loop_exit
      _
    %451 = vsyncpa [#allocation4], 1
    %s452 = scalar_lea.sflag [#allocation4], 1
    %453 = vsyncpa %s452, 1
    %454 = vsyncpa [#allocation5], 1
    %s455 = scalar_lea.sflag [#allocation5], 1
    %456 = vsyncpa %s455, 1

</llo_original>
